<compile_context>
chip_gen: v6e
topology: v6e:2x2x1
jax: 0.10.0
libtpu: 0.0.40
codegen_flags: <defaults>
</compile_context>

<pallas_src>
import functools

import jax
import jax.numpy as jnp
from jax import lax
from jax.experimental import pallas as pl
from jax.experimental.pallas import tpu as pltpu

_LANE = 128
_SUBLANE = 8
_MAX_TILE_M = 512
_MAX_TILE_K = 512
_VMEM_BUDGET = 20 * 1024 * 1024   # conservative: fits v5e/v6e/v7x scoped VMEM
_VMEM_LIMIT = 32 * 1024 * 1024


def _round_up(x, m):
    return ((x + m - 1) // m) * m


# ----------------------------- Pallas kernel ------------------------------ #
def _conv_matmul_kernel(p_ref, w_ref, b_ref, o_ref, acc_ref):
    # p_ref:   (TM, TK)  bf16/f32 im2col patch tile
    # w_ref:   (TK, CO)  weight tile (CO lane-padded to 128)
    # b_ref:   (1,  CO)  f32 bias row
    # o_ref:   (TM, CO)  output tile (resident across the k axis)
    # acc_ref: (TM, CO)  f32 accumulator scratch
    k = pl.program_id(1)

    @pl.when(k == 0)
    def _():
        acc_ref[...] = jnp.zeros_like(acc_ref)

    acc_ref[...] += jnp.dot(p_ref[...], w_ref[...],
                            preferred_element_type=jnp.float32)

    @pl.when(k == pl.num_programs(1) - 1)
    def _():
        o_ref[...] = (acc_ref[...] + b_ref[...].astype(jnp.float32)).astype(o_ref.dtype)


def _pallas_matmul_bias(patches, w_mat, bias_row, out_dtype):
    """(M, K) @ (K, C_out) + bias on the MXU, with K / C_out lane-padded."""
    m, k = patches.shape
    _, c_out = w_mat.shape
    in_bytes = patches.dtype.itemsize
    out_bytes = jnp.dtype(out_dtype).itemsize

    c_out_pad = _round_up(c_out, _LANE)

    # Tile selection under a conservative VMEM budget (double-buffered blocks),
    # so the same code fits v7x's smaller VMEM as well as v5e/v6e.
    tile_m = min(_MAX_TILE_M, _round_up(m, _SUBLANE))
    tile_k = min(_MAX_TILE_K, _round_up(k, _LANE))

    def _vmem_bytes(tm, tk):
        return (2 * tm * tk * in_bytes            # patches (double-buffered)
                + 2 * tk * c_out_pad * in_bytes   # weights
                + 2 * 1 * c_out_pad * 4           # bias row
                + 2 * tm * c_out_pad * out_bytes  # output
                + tm * c_out_pad * 4)             # f32 accumulator scratch

    while _vmem_bytes(tile_m, tile_k) > _VMEM_BUDGET and tile_m > _SUBLANE:
        tile_m = max(_SUBLANE, tile_m // 2)
    while _vmem_bytes(tile_m, tile_k) > _VMEM_BUDGET and tile_k > _LANE:
        tile_k = max(_LANE, tile_k // 2)

    m_pad = _round_up(m, tile_m)
    k_pad = _round_up(k, tile_k)

    # Zero padding: padded K columns / C_out lanes contribute nothing.
    patches = jnp.pad(patches, ((0, m_pad - m), (0, k_pad - k)))
    w_mat = jnp.pad(w_mat, ((0, k_pad - k), (0, c_out_pad - c_out)))
    bias_row = jnp.pad(bias_row.astype(jnp.float32),
                       ((0, 0), (0, c_out_pad - c_out)))

    cost = pl.CostEstimate(
        flops=2 * m * k * c_out,
        transcendentals=0,
        bytes_accessed=(patches.size * in_bytes + w_mat.size * in_bytes
                        + bias_row.size * 4 + m_pad * c_out_pad * out_bytes),
    )

    out = pl.pallas_call(
        _conv_matmul_kernel,
        out_shape=jax.ShapeDtypeStruct((m_pad, c_out_pad), out_dtype),
        grid_spec=pltpu.PrefetchScalarGridSpec(
            num_scalar_prefetch=0,
            grid=(m_pad // tile_m, k_pad // tile_k),
            in_specs=[
                pl.BlockSpec((tile_m, tile_k), lambda i, kk: (i, kk)),
                pl.BlockSpec((tile_k, c_out_pad), lambda i, kk: (kk, 0)),
                pl.BlockSpec((1, c_out_pad), lambda i, kk: (0, 0)),
            ],
            out_specs=pl.BlockSpec((tile_m, c_out_pad), lambda i, kk: (i, 0)),
            scratch_shapes=[pltpu.VMEM((tile_m, c_out_pad), jnp.float32)],
        ),
        compiler_params=pltpu.CompilerParams(
            dimension_semantics=("parallel", "arbitrary"),
            vmem_limit_bytes=_VMEM_LIMIT,
        ),
        cost_estimate=cost,
    )(patches, w_mat, bias_row)
    return out[:m, :c_out]


# ------------------------------ ConvSN glue -------------------------------- #
def _spectral_normalize(weight, u=None, n_power_iterations=1, eps=1e-12):
    """PyTorch spectral_norm semantics: divide weight by its top singular value,
    estimated by power iteration on weight.reshape(C_out, -1)."""
    w2d = weight.reshape(weight.shape[0], -1)
    if u is None:
        u = jnp.ones((w2d.shape[0],), w2d.dtype)
        u = u / jnp.maximum(jnp.linalg.norm(u), eps)
    v = None
    for _ in range(max(1, n_power_iterations)):
        v = w2d.T @ u
        v = v / jnp.maximum(jnp.linalg.norm(v), eps)   # clamp_min(eps), like torch
        u = w2d @ v
        u = u / jnp.maximum(jnp.linalg.norm(u), eps)
    sigma = u @ (w2d @ v)
    return weight / sigma, u


def conv_sn_forward(x, weight, bias=None, *, padding=0, stride=2,
                    pad_mode="zero", use_bias=True, sn=False, sn_u=None,
                    compute_dtype=jnp.bfloat16):
    """ConvSN forward.  x: (N, C_in, H, W) NCHW; weight: (C_out, C_in, KH, KW)."""
    pad_jnp_mode = {"zero": "constant", "same": "edge", "reflect": "reflect"}
    if pad_mode not in pad_jnp_mode:
        raise NotImplementedError(pad_mode)

    if sn:
        weight, _ = _spectral_normalize(weight, sn_u)

    n, c_in, h, w = x.shape
    c_out, _, kh, kw = weight.shape
    p = int(padding)

    # pad layer (ZeroPad2d / ReplicationPad2d / ReflectionPad2d equivalents)
    xp = jnp.pad(x, ((0, 0), (0, 0), (p, p), (p, p)), mode=pad_jnp_mode[pad_mode])
    hp, wp = h + 2 * p, w + 2 * p
    oh = (hp - kh) // stride + 1
    ow = (wp - kw) // stride + 1

    # NHWC (lane-dense channels) then im2col (pure-JAX glue).
    # TODO(synk): fuse the im2col gather into the Pallas pipeline to avoid the
    #             HBM round-trip of the patch matrix.
    xp = jnp.transpose(xp, (0, 2, 3, 1))  # (N, Hp, Wp, C_in)
    taps = []
    for i in range(kh):
        for j in range(kw):
            taps.append(xp[:, i:i + stride * oh:stride, j:j + stride * ow:stride, :])
    patches = jnp.concatenate(taps, axis=-1).reshape(n * oh * ow, kh * kw * c_in)

    # weight to (K, C_out), K ordered (kh, kw, ci) to match the patches.
    w_mat = jnp.transpose(weight, (2, 3, 1, 0)).reshape(kh * kw * c_in, c_out)

    if bias is None or not use_bias:
        bias_row = jnp.zeros((1, c_out), jnp.float32)
    else:
        bias_row = bias.reshape(1, c_out).astype(jnp.float32)

    # bf16 operands for the MXU, f32 accumulation/bias inside the kernel.
    out = _pallas_matmul_bias(patches.astype(compute_dtype),
                              w_mat.astype(compute_dtype),
                              bias_row, x.dtype)             # (N*OH*OW, C_out)
    out = out.reshape(n, oh, ow, c_out)
    return jnp.transpose(out, (0, 3, 1, 2))                   # NCHW like nn.Conv2d


# --------------------------------- main ------------------------------------ #
if __name__ == "__main__":
    key = jax.random.PRNGKey(0)
    kx, kw_, kb, ku = jax.random.split(key, 4)

    N, C_IN, H, W = 2, 4, 16, 16
    C_OUT, KSIZE, STRIDE, PAD = 8, 4, 2, 1

    x = jax.random.normal(kx, (N, C_IN, H, W), jnp.float32)
    fan_in = C_IN * KSIZE * KSIZE
    bound = 1.0 / float(fan_in) ** 0.5
    weight = jax.random.uniform(kw_, (C_OUT, C_IN, KSIZE, KSIZE), jnp.float32,
                                minval=-bound, maxval=bound)
    bias = jax.random.uniform(kb, (C_OUT,), jnp.float32, minval=-bound, maxval=bound)
    sn_u = jax.random.normal(ku, (C_OUT,), jnp.float32)
    sn_u = sn_u / jnp.linalg.norm(sn_u)

    fwd_f32 = jax.jit(functools.partial(
        conv_sn_forward, padding=PAD, stride=STRIDE, pad_mode="zero",
        use_bias=True, sn=False, compute_dtype=jnp.float32))
    fwd_bf16 = jax.jit(functools.partial(
        conv_sn_forward, padding=PAD, stride=STRIDE, pad_mode="zero",
        use_bias=True, sn=False, compute_dtype=jnp.bfloat16))
    fwd_sn = jax.jit(functools.partial(
        conv_sn_forward, padding=PAD, stride=STRIDE, pad_mode="zero",
        use_bias=True, sn=True, compute_dtype=jnp.bfloat16))

    # XLA reference (zero-pad + stride-2 conv + bias).
    ref = lax.conv_general_dilated(
        x, weight, window_strides=(STRIDE, STRIDE),
        padding=[(PAD, PAD), (PAD, PAD)],
        dimension_numbers=("NCHW", "OIHW", "NCHW"),
    ) + bias[None, :, None, None]
    OH = (H + 2 * PAD - KSIZE) // STRIDE + 1
    OW = (W + 2 * PAD - KSIZE) // STRIDE + 1

    # exact f32 path
    out_f32 = jax.block_until_ready(fwd_f32(x, weight, bias))
    assert out_f32.shape == ref.shape == (N, C_OUT, OH, OW)
    assert jnp.allclose(out_f32, ref, atol=1e-4, rtol=1e-4)

    # fast bf16-operand path (f32 accumulation) — looser tolerance
    out_bf16 = jax.block_until_ready(fwd_bf16(x, weight, bias))
    assert out_bf16.shape == ref.shape
    assert jnp.allclose(out_bf16, ref, atol=5e-2, rtol=5e-2)

    # spectral-norm path
    out_sn = jax.block_until_ready(fwd_sn(x, weight, bias, sn_u=sn_u))
    w_sn, _ = _spectral_normalize(weight, sn_u)
    ref_sn = lax.conv_general_dilated(
        x, w_sn, window_strides=(STRIDE, STRIDE),
        padding=[(PAD, PAD), (PAD, PAD)],
        dimension_numbers=("NCHW", "OIHW", "NCHW"),
    ) + bias[None, :, None, None]
    assert out_sn.shape == ref_sn.shape
    assert jnp.allclose(out_sn, ref_sn, atol=5e-2, rtol=5e-2)

    print("KERNEL_OK")
</pallas_src>

<mosaic_0001>
module attributes {stable_mosaic.version = 11 : i64} {
  func.func @_conv_matmul_kernel(%arg0: i32, %arg1: i32, %arg2: memref<128x128xf32, #tpu.memory_space<vmem>>, %arg3: memref<128x128xf32, #tpu.memory_space<vmem>>, %arg4: memref<1x128xf32, #tpu.memory_space<vmem>>, %arg5: memref<128x128xf32, #tpu.memory_space<vmem>>, %arg6: memref<128x128xf32, #tpu.memory_space<vmem>>) attributes {dimension_semantics = [#tpu.dimension_semantics<parallel>, #tpu.dimension_semantics<arbitrary>], iteration_bounds = array<i64: 1, 1>, scalar_prefetch = 0 : i64, scratch_operands = 1 : i64, tpu.core_type = #tpu.core_type<tc>, window_params = [{transform_indices = @transform_0, window_bounds = array<i64: 128, 128>}, {transform_indices = @transform_1, window_bounds = array<i64: 128, 128>}, {pipeline_mode = #tpu.pipeline_mode<synchronous>, transform_indices = @transform_2, window_bounds = array<i64: 1, 128>}, {transform_indices = @transform_3, window_bounds = array<i64: 128, 128>}]} {
    %c0_i32 = arith.constant 0 : i32
    %0 = arith.cmpi eq, %arg1, %c0_i32 : i32
    %1 = arith.extui %0 : i1 to i32
    %c0_i32_0 = arith.constant 0 : i32
    %2 = arith.cmpi ne, %1, %c0_i32_0 : i32
    scf.if %2 {
      %cst_10 = arith.constant 0.000000e+00 : f32
      %12 = vector.broadcast %cst_10 : f32 to vector<128x128xf32>
      %c0_11 = arith.constant 0 : index
      %c0_12 = arith.constant 0 : index
      %13 = vector.load %arg6[%c0_11, %c0_12] : memref<128x128xf32, #tpu.memory_space<vmem>>, vector<128x128xf32>
      tpu.vector_store %arg6[%c0_11, %c0_12], %12 {strides = array<i32>} : memref<128x128xf32, #tpu.memory_space<vmem>>, vector<128x128xf32>,
    } else {
    }
    %c0 = arith.constant 0 : index
    %c0_1 = arith.constant 0 : index
    %3 = vector.load %arg6[%c0, %c0_1] : memref<128x128xf32, #tpu.memory_space<vmem>>, vector<128x128xf32>
    %c0_2 = arith.constant 0 : index
    %c0_3 = arith.constant 0 : index
    %4 = vector.load %arg2[%c0_2, %c0_3] : memref<128x128xf32, #tpu.memory_space<vmem>>, vector<128x128xf32>
    %c0_4 = arith.constant 0 : index
    %c0_5 = arith.constant 0 : index
    %5 = vector.load %arg3[%c0_4, %c0_5] : memref<128x128xf32, #tpu.memory_space<vmem>>, vector<128x128xf32>
    %cst = arith.constant dense<0.000000e+00> : vector<128x128xf32>
    %6 = tpu.matmul %4, %5, %cst {dimension_numbers = #tpu.dot_dimension_numbers<[1], [0], [0], [1], [0, 0, 1, 1], [], []>} : vector<128x128xf32>, vector<128x128xf32>, vector<128x128xf32> -> vector<128x128xf32>
    %7 = arith.addf %3, %6 : vector<128x128xf32>
    %c0_6 = arith.constant 0 : index
    %c0_7 = arith.constant 0 : index
    %8 = vector.load %arg6[%c0_6, %c0_7] : memref<128x128xf32, #tpu.memory_space<vmem>>, vector<128x128xf32>
    tpu.vector_store %arg6[%c0_6, %c0_7], %7 {strides = array<i32>} : memref<128x128xf32, #tpu.memory_space<vmem>>, vector<128x128xf32>,
    %c0_i32_8 = arith.constant 0 : i32
    %9 = arith.cmpi eq, %arg1, %c0_i32_8 : i32
    %10 = arith.extui %9 : i1 to i32
    %c0_i32_9 = arith.constant 0 : i32
    %11 = arith.cmpi ne, %10, %c0_i32_9 : i32
    scf.if %11 {
      %c0_10 = arith.constant 0 : index
      %c0_11 = arith.constant 0 : index
      %12 = vector.load %arg6[%c0_10, %c0_11] : memref<128x128xf32, #tpu.memory_space<vmem>>, vector<128x128xf32>
      %c0_12 = arith.constant 0 : index
      %c0_13 = arith.constant 0 : index
      %13 = vector.load %arg4[%c0_12, %c0_13] : memref<1x128xf32, #tpu.memory_space<vmem>>, vector<1x128xf32>
      %14 = vector.broadcast %13 : vector<1x128xf32> to vector<128x128xf32>
      %15 = arith.addf %12, %14 : vector<128x128xf32>
      %c0_14 = arith.constant 0 : index
      %c0_15 = arith.constant 0 : index
      %16 = vector.load %arg5[%c0_14, %c0_15] : memref<128x128xf32, #tpu.memory_space<vmem>>, vector<128x128xf32>
      tpu.vector_store %arg5[%c0_14, %c0_15], %15 {strides = array<i32>} : memref<128x128xf32, #tpu.memory_space<vmem>>, vector<128x128xf32>,
    } else {
    }
    return
  }
  func.func @transform_0(%arg0: i32, %arg1: i32) -> (i32, i32) {
    %c0_i32 = arith.constant 0 : i32
    return %arg0, %arg1 : i32, i32
  }
  func.func @transform_1(%arg0: i32, %arg1: i32) -> (i32, i32) {
    %c0_i32 = arith.constant 0 : i32
    %c0_i32_0 = arith.constant 0 : i32
    return %arg1, %c0_i32 : i32, i32
  }
  func.func @transform_2(%arg0: i32, %arg1: i32) -> (i32, i32) {
    %c0_i32 = arith.constant 0 : i32
    %c0_i32_0 = arith.constant 0 : i32
    %c0_i32_1 = arith.constant 0 : i32
    return %c0_i32, %c0_i32_0 : i32, i32
  }
  func.func @transform_3(%arg0: i32, %arg1: i32) -> (i32, i32) {
    %c0_i32 = arith.constant 0 : i32
    %c0_i32_0 = arith.constant 0 : i32
    return %arg0, %c0_i32 : i32, i32
  }
}

</mosaic_0001>

<llo_original>
// kernel: conv_sn_forward.1
$region0: #{conv_sn_forward.1}
  #allocation0 [shape = 'u32[]', space=smem, size = 0x4, offset = 0x4, fixed_abs, tag = 'smem constant byte address 0x4 - core index']
  #allocation1 [shape = 'u32[144,128]{1,0:T(1,128)}', space=vmem, size = 0x12000, scoped, tag = 'internal scratch']
  #allocation2 [shape = 'f32[128,128]{1,0:T(8,128)}', space=vmem, size = 0x10000, scoped, tag = 'scratch operand']
  %s0 = inlined_call_operand.vmem [shape: f32[128,128], index: 0, kind: input, shape index: {}]
  %s1 = inlined_call_operand.vmem [shape: f32[128,128], index: 1, kind: input, shape index: {}]
  %s2 = inlined_call_operand.vmem [shape: f32[1,128], index: 2, kind: input, shape index: {}]
  %s3 = inlined_call_operand.vmem [shape: f32[128,128], index: 3, kind: output, shape index: {}]
  %s4 = sld [smem:[#allocation0]]
  $region30: #{conv_sn_forward.1} parent=0
    _
  %s6 = ssub.s32 1, %s4
  %s7 = scalar_select 0, %s6, %s4
  // Predicated region
  $region2: #{conv_sn_forward.1} parent=0 // pred_check
    _
  $region3: #{conv_sn_forward.1} parent=0 // pred_check_branch
    %9 = sbr.rel (0) target = $region5
  $region4: #{conv_sn_forward.1} parent=0 // pred_region
    _
  $region5: #{conv_sn_forward.1} parent=0 // pred_fallthru
    _
  // Predicated region
  $region6: #{conv_sn_forward.1} parent=0 // pred_check
    _
  $region7: #{conv_sn_forward.1} parent=0 // pred_check_branch
    %11 = sbr.rel (0) target = $region9
  $region8: #{conv_sn_forward.1} parent=0 // pred_region
    _
  $region9: #{conv_sn_forward.1} parent=0 // pred_fallthru
    _
  // Predicated region
  $region10: #{conv_sn_forward.1} parent=0 // pred_check
    _
  $region11: #{conv_sn_forward.1} parent=0 // pred_check_branch
    %13 = sbr.rel (0) target = $region13
  $region12: #{conv_sn_forward.1} parent=0 // pred_region
    _
  $region13: #{conv_sn_forward.1} parent=0 // pred_fallthru
    _
  %p14 = scmp.eq.s32.totalorder 0, 0
  // Predicated region
  $region14: #{conv_sn_forward.1} parent=0 // pred_check
    %p15 = pneg %p14
  $region15: #{conv_sn_forward.1} parent=0 // pred_check_branch
    %17 = sbr.rel (%p15) target = $region17
  $region16: #{conv_sn_forward.1} parent=0 // pred_region
    %18 = vst [vmem:[#allocation2] sm:$0xff] 0.0
    %19 = vst [vmem:[#allocation2 + $0x8] sm:$0xff] 0.0
    %20 = vst [vmem:[#allocation2 + $0x10] sm:$0xff] 0.0
    %21 = vst [vmem:[#allocation2 + $0x18] sm:$0xff] 0.0
    %22 = vst [vmem:[#allocation2 + $0x20] sm:$0xff] 0.0
    %23 = vst [vmem:[#allocation2 + $0x28] sm:$0xff] 0.0
    %24 = vst [vmem:[#allocation2 + $0x30] sm:$0xff] 0.0
    %25 = vst [vmem:[#allocation2 + $0x38] sm:$0xff] 0.0
    %26 = vst [vmem:[#allocation2 + $0x40] sm:$0xff] 0.0
    %27 = vst [vmem:[#allocation2 + $0x48] sm:$0xff] 0.0
    %28 = vst [vmem:[#allocation2 + $0x50] sm:$0xff] 0.0
    %29 = vst [vmem:[#allocation2 + $0x58] sm:$0xff] 0.0
    %30 = vst [vmem:[#allocation2 + $0x60] sm:$0xff] 0.0
    %31 = vst [vmem:[#allocation2 + $0x68] sm:$0xff] 0.0
    %32 = vst [vmem:[#allocation2 + $0x70] sm:$0xff] 0.0
    %33 = vst [vmem:[#allocation2 + $0x78] sm:$0xff] 0.0
  $region17: #{conv_sn_forward.1} parent=0 // pred_fallthru
    _
  %v34 = vld [vmem:[#allocation2] sm:$0xff]
  %v35 = vld [vmem:[#allocation2 + $0x8] sm:$0xff]
  %v36 = vld [vmem:[#allocation2 + $0x10] sm:$0xff]
  %v37 = vld [vmem:[#allocation2 + $0x18] sm:$0xff]
  %v38 = vld [vmem:[#allocation2 + $0x20] sm:$0xff]
  %v39 = vld [vmem:[#allocation2 + $0x28] sm:$0xff]
  %v40 = vld [vmem:[#allocation2 + $0x30] sm:$0xff]
  %v41 = vld [vmem:[#allocation2 + $0x38] sm:$0xff]
  %v42 = vld [vmem:[#allocation2 + $0x40] sm:$0xff]
  %v43 = vld [vmem:[#allocation2 + $0x48] sm:$0xff]
  %v44 = vld [vmem:[#allocation2 + $0x50] sm:$0xff]
  %v45 = vld [vmem:[#allocation2 + $0x58] sm:$0xff]
  %v46 = vld [vmem:[#allocation2 + $0x60] sm:$0xff]
  %v47 = vld [vmem:[#allocation2 + $0x68] sm:$0xff]
  %v48 = vld [vmem:[#allocation2 + $0x70] sm:$0xff]
  %v49 = vld [vmem:[#allocation2 + $0x78] sm:$0xff]
  %v50 = vld [vmem:[%s0] sm:$0xff]
  %v51 = vld [vmem:[%s0 + $0x8] sm:$0xff]
  %v52 = vld [vmem:[%s0 + $0x10] sm:$0xff]
  %v53 = vld [vmem:[%s0 + $0x18] sm:$0xff]
  %v54 = vld [vmem:[%s0 + $0x20] sm:$0xff]
  %v55 = vld [vmem:[%s0 + $0x28] sm:$0xff]
  %v56 = vld [vmem:[%s0 + $0x30] sm:$0xff]
  %v57 = vld [vmem:[%s0 + $0x38] sm:$0xff]
  %v58 = vld [vmem:[%s0 + $0x40] sm:$0xff]
  %v59 = vld [vmem:[%s0 + $0x48] sm:$0xff]
  %v60 = vld [vmem:[%s0 + $0x50] sm:$0xff]
  %v61 = vld [vmem:[%s0 + $0x58] sm:$0xff]
  %v62 = vld [vmem:[%s0 + $0x60] sm:$0xff]
  %v63 = vld [vmem:[%s0 + $0x68] sm:$0xff]
  %v64 = vld [vmem:[%s0 + $0x70] sm:$0xff]
  %v65 = vld [vmem:[%s0 + $0x78] sm:$0xff]
  %v66 = vld [vmem:[%s1] sm:$0xff]
  %v67 = vld [vmem:[%s1 + $0x8] sm:$0xff]
  %v68 = vld [vmem:[%s1 + $0x10] sm:$0xff]
  %v69 = vld [vmem:[%s1 + $0x18] sm:$0xff]
  %v70 = vld [vmem:[%s1 + $0x20] sm:$0xff]
  %v71 = vld [vmem:[%s1 + $0x28] sm:$0xff]
  %v72 = vld [vmem:[%s1 + $0x30] sm:$0xff]
  %v73 = vld [vmem:[%s1 + $0x38] sm:$0xff]
  %v74 = vld [vmem:[%s1 + $0x40] sm:$0xff]
  %v75 = vld [vmem:[%s1 + $0x48] sm:$0xff]
  %v76 = vld [vmem:[%s1 + $0x50] sm:$0xff]
  %v77 = vld [vmem:[%s1 + $0x58] sm:$0xff]
  %v78 = vld [vmem:[%s1 + $0x60] sm:$0xff]
  %v79 = vld [vmem:[%s1 + $0x68] sm:$0xff]
  %v80 = vld [vmem:[%s1 + $0x70] sm:$0xff]
  %v81 = vld [vmem:[%s1 + $0x78] sm:$0xff]
  %82 = vmatprep.subr.mxu0 0.0
  %83 = vmatpush1.msra.mxu0 %v81
  %84 = vmatprep.subr.mxu0 0.0
  %85 = vmatpush1.msra.mxu0 %v80
  %86 = vmatprep.subr.mxu0 0.0
  %87 = vmatpush1.msra.mxu0 %v79
  %88 = vmatprep.subr.mxu0 0.0
  %89 = vmatpush1.msra.mxu0 %v78
  %90 = vmatprep.subr.mxu0 0.0
  %91 = vmatpush1.msra.mxu0 %v77
  %92 = vmatprep.subr.mxu0 0.0
  %93 = vmatpush1.msra.mxu0 %v76
  %94 = vmatprep.subr.mxu0 0.0
  %95 = vmatpush1.msra.mxu0 %v75
  %96 = vmatprep.subr.mxu0 0.0
  %97 = vmatpush1.msra.mxu0 %v74
  %98 = vmatprep.subr.mxu0 0.0
  %99 = vmatpush1.msra.mxu0 %v73
  %100 = vmatprep.subr.mxu0 0.0
  %101 = vmatpush1.msra.mxu0 %v72
  %102 = vmatprep.subr.mxu0 0.0
  %103 = vmatpush1.msra.mxu0 %v71
  %104 = vmatprep.subr.mxu0 0.0
  %105 = vmatpush1.msra.mxu0 %v70
  %106 = vmatprep.subr.mxu0 0.0
  %107 = vmatpush1.msra.mxu0 %v69
  %108 = vmatprep.subr.mxu0 0.0
  %109 = vmatpush1.msra.mxu0 %v68
  %110 = vmatprep.subr.mxu0 0.0
  %111 = vmatpush1.msra.mxu0 %v67
  %112 = vmatprep.subr.mxu0 0.0
  %113 = vmatpush1.msra.mxu0 %v66
  %114 = vmatprep.subr.mxu0 0.0
  %115 = vmatpush2.msra.mxu0 0.0
  %116 = vmatprep.subr.mxu0 0.0
  %117 = vmatpush2.msra.mxu0 0.0
  %118 = vmatprep.subr.mxu0 0.0
  %119 = vmatpush2.msra.mxu0 0.0
  %120 = vmatprep.subr.mxu0 0.0
  %121 = vmatpush2.msra.mxu0 0.0
  %122 = vmatprep.subr.mxu0 0.0
  %123 = vmatpush2.msra.mxu0 0.0
  %124 = vmatprep.subr.mxu0 0.0
  %125 = vmatpush2.msra.mxu0 0.0
  %126 = vmatprep.subr.mxu0 0.0
  %127 = vmatpush2.msra.mxu0 0.0
  %128 = vmatprep.subr.mxu0 0.0
  %129 = vmatpush2.msra.mxu0 0.0
  %130 = vmatprep.subr.mxu0 0.0
  %131 = vmatpush2.msra.mxu0 0.0
  %132 = vmatprep.subr.mxu0 0.0
  %133 = vmatpush2.msra.mxu0 0.0
  %134 = vmatprep.subr.mxu0 0.0
  %135 = vmatpush2.msra.mxu0 0.0
  %136 = vmatprep.subr.mxu0 0.0
  %137 = vmatpush2.msra.mxu0 0.0
  %138 = vmatprep.subr.mxu0 0.0
  %139 = vmatpush2.msra.mxu0 0.0
  %140 = vmatprep.subr.mxu0 0.0
  %141 = vmatpush2.msra.mxu0 0.0
  %142 = vmatprep.subr.mxu0 0.0
  %143 = vmatpush2.msra.mxu0 0.0
  %144 = vmatprep.subr.mxu0 0.0
  %145 = vmatpush2.msra.mxu0 0.0
  %146 = vmatprep.mubr.f32.mxu0 0.0
  %147 = vmatmul.mubr.f32.gmra.mxu0 %v50
  %v148 = vpop.f32.mrf.mxu0
  %v149 = vadd.f32 0.0, %v148
  %v150 = vpop.f32.mrf.mxu0
  %151 = vmatprep.mubr.f32.mxu0 0.0
  %152 = vmatmul.mubr.f32.gmra.mxu0 %v51
  %v153 = vpop.f32.mrf.mxu0
  %v154 = vadd.f32 0.0, %v153
  %v155 = vpop.f32.mrf.mxu0
  %156 = vmatprep.mubr.f32.mxu0 0.0
  %157 = vmatmul.mubr.f32.gmra.mxu0 %v52
  %v158 = vpop.f32.mrf.mxu0
  %v159 = vadd.f32 0.0, %v158
  %v160 = vpop.f32.mrf.mxu0
  %161 = vmatprep.mubr.f32.mxu0 0.0
  %162 = vmatmul.mubr.f32.gmra.mxu0 %v53
  %v163 = vpop.f32.mrf.mxu0
  %v164 = vadd.f32 0.0, %v163
  %v165 = vpop.f32.mrf.mxu0
  %166 = vmatprep.mubr.f32.mxu0 0.0
  %167 = vmatmul.mubr.f32.gmra.mxu0 %v54
  %v168 = vpop.f32.mrf.mxu0
  %v169 = vadd.f32 0.0, %v168
  %v170 = vpop.f32.mrf.mxu0
  %171 = vmatprep.mubr.f32.mxu0 0.0
  %172 = vmatmul.mubr.f32.gmra.mxu0 %v55
  %v173 = vpop.f32.mrf.mxu0
  %v174 = vadd.f32 0.0, %v173
  %v175 = vpop.f32.mrf.mxu0
  %176 = vmatprep.mubr.f32.mxu0 0.0
  %177 = vmatmul.mubr.f32.gmra.mxu0 %v56
  %v178 = vpop.f32.mrf.mxu0
  %v179 = vadd.f32 0.0, %v178
  %v180 = vpop.f32.mrf.mxu0
  %181 = vmatprep.mubr.f32.mxu0 0.0
  %182 = vmatmul.mubr.f32.gmra.mxu0 %v57
  %v183 = vpop.f32.mrf.mxu0
  %v184 = vadd.f32 0.0, %v183
  %v185 = vpop.f32.mrf.mxu0
  %186 = vmatprep.mubr.f32.mxu0 0.0
  %187 = vmatmul.mubr.f32.gmra.mxu0 %v58
  %v188 = vpop.f32.mrf.mxu0
  %v189 = vadd.f32 0.0, %v188
  %v190 = vpop.f32.mrf.mxu0
  %191 = vmatprep.mubr.f32.mxu0 0.0
  %192 = vmatmul.mubr.f32.gmra.mxu0 %v59
  %v193 = vpop.f32.mrf.mxu0
  %v194 = vadd.f32 0.0, %v193
  %v195 = vpop.f32.mrf.mxu0
  %196 = vmatprep.mubr.f32.mxu0 0.0
  %197 = vmatmul.mubr.f32.gmra.mxu0 %v60
  %v198 = vpop.f32.mrf.mxu0
  %v199 = vadd.f32 0.0, %v198
  %v200 = vpop.f32.mrf.mxu0
  %201 = vmatprep.mubr.f32.mxu0 0.0
  %202 = vmatmul.mubr.f32.gmra.mxu0 %v61
  %v203 = vpop.f32.mrf.mxu0
  %v204 = vadd.f32 0.0, %v203
  %v205 = vpop.f32.mrf.mxu0
  %206 = vmatprep.mubr.f32.mxu0 0.0
  %207 = vmatmul.mubr.f32.gmra.mxu0 %v62
  %v208 = vpop.f32.mrf.mxu0
  %v209 = vadd.f32 0.0, %v208
  %v210 = vpop.f32.mrf.mxu0
  %211 = vmatprep.mubr.f32.mxu0 0.0
  %212 = vmatmul.mubr.f32.gmra.mxu0 %v63
  %v213 = vpop.f32.mrf.mxu0
  %v214 = vadd.f32 0.0, %v213
  %v215 = vpop.f32.mrf.mxu0
  %216 = vmatprep.mubr.f32.mxu0 0.0
  %217 = vmatmul.mubr.f32.gmra.mxu0 %v64
  %v218 = vpop.f32.mrf.mxu0
  %v219 = vadd.f32 0.0, %v218
  %v220 = vpop.f32.mrf.mxu0
  %221 = vmatprep.mubr.f32.mxu0 0.0
  %222 = vmatmul.mubr.f32.gmra.mxu0 %v65
  %v223 = vpop.f32.mrf.mxu0
  %v224 = vadd.f32 0.0, %v223
  %v225 = vpop.f32.mrf.mxu0
  %226 = vdwg.mxu0
  %v227 = vadd.f32 %v34, %v149
  %v228 = vadd.f32 %v35, %v154
  %v229 = vadd.f32 %v36, %v159
  %v230 = vadd.f32 %v37, %v164
  %v231 = vadd.f32 %v38, %v169
  %v232 = vadd.f32 %v39, %v174
  %v233 = vadd.f32 %v40, %v179
  %v234 = vadd.f32 %v41, %v184
  %v235 = vadd.f32 %v42, %v189
  %v236 = vadd.f32 %v43, %v194
  %v237 = vadd.f32 %v44, %v199
  %v238 = vadd.f32 %v45, %v204
  %v239 = vadd.f32 %v46, %v209
  %v240 = vadd.f32 %v47, %v214
  %v241 = vadd.f32 %v48, %v219
  %v242 = vadd.f32 %v49, %v224
  %243 = vst [vmem:[#allocation2] sm:$0xff] %v227
  %244 = vst [vmem:[#allocation2 + $0x8] sm:$0xff] %v228
  %245 = vst [vmem:[#allocation2 + $0x10] sm:$0xff] %v229
  %246 = vst [vmem:[#allocation2 + $0x18] sm:$0xff] %v230
  %247 = vst [vmem:[#allocation2 + $0x20] sm:$0xff] %v231
  %248 = vst [vmem:[#allocation2 + $0x28] sm:$0xff] %v232
  %249 = vst [vmem:[#allocation2 + $0x30] sm:$0xff] %v233
  %250 = vst [vmem:[#allocation2 + $0x38] sm:$0xff] %v234
  %251 = vst [vmem:[#allocation2 + $0x40] sm:$0xff] %v235
  %252 = vst [vmem:[#allocation2 + $0x48] sm:$0xff] %v236
  %253 = vst [vmem:[#allocation2 + $0x50] sm:$0xff] %v237
  %254 = vst [vmem:[#allocation2 + $0x58] sm:$0xff] %v238
  %255 = vst [vmem:[#allocation2 + $0x60] sm:$0xff] %v239
  %256 = vst [vmem:[#allocation2 + $0x68] sm:$0xff] %v240
  %257 = vst [vmem:[#allocation2 + $0x70] sm:$0xff] %v241
  %258 = vst [vmem:[#allocation2 + $0x78] sm:$0xff] %v242
  // Predicated region
  $region18: #{conv_sn_forward.1} parent=0 // pred_check
    %p259 = pneg %p14
  $region19: #{conv_sn_forward.1} parent=0 // pred_check_branch
    %261 = sbr.rel (%p259) target = $region21
  $region20: #{conv_sn_forward.1} parent=0 // pred_region
    %v262 = vld [vmem:[#allocation2] sm:$0xff]
    %v263 = vld [vmem:[#allocation2 + $0x8] sm:$0xff]
    %v264 = vld [vmem:[#allocation2 + $0x10] sm:$0xff]
    %v265 = vld [vmem:[#allocation2 + $0x18] sm:$0xff]
    %v266 = vld [vmem:[#allocation2 + $0x20] sm:$0xff]
    %v267 = vld [vmem:[#allocation2 + $0x28] sm:$0xff]
    %v268 = vld [vmem:[#allocation2 + $0x30] sm:$0xff]
    %v269 = vld [vmem:[#allocation2 + $0x38] sm:$0xff]
    %v270 = vld [vmem:[#allocation2 + $0x40] sm:$0xff]
    %v271 = vld [vmem:[#allocation2 + $0x48] sm:$0xff]
    %v272 = vld [vmem:[#allocation2 + $0x50] sm:$0xff]
    %v273 = vld [vmem:[#allocation2 + $0x58] sm:$0xff]
    %v274 = vld [vmem:[#allocation2 + $0x60] sm:$0xff]
    %v275 = vld [vmem:[#allocation2 + $0x68] sm:$0xff]
    %v276 = vld [vmem:[#allocation2 + $0x70] sm:$0xff]
    %v277 = vld [vmem:[#allocation2 + $0x78] sm:$0xff]
    %v278 = vld [vmem:[%s2] sm:$0x1]
    %v280 = vlaneseq
    %v281 = vshrl.u32 %v280, 7
    %v282 = vsub.s32 0, %v281
    %v283 = vrot.slane %v278, %v282
    %v285 = vadd.f32 %v262, %v283
    %v286 = vadd.f32 %v263, %v283
    %v287 = vadd.f32 %v264, %v283
    %v288 = vadd.f32 %v265, %v283
    %v289 = vadd.f32 %v266, %v283
    %v290 = vadd.f32 %v267, %v283
    %v291 = vadd.f32 %v268, %v283
    %v292 = vadd.f32 %v269, %v283
    %v293 = vadd.f32 %v270, %v283
    %v294 = vadd.f32 %v271, %v283
    %v295 = vadd.f32 %v272, %v283
    %v296 = vadd.f32 %v273, %v283
    %v297 = vadd.f32 %v274, %v283
    %v298 = vadd.f32 %v275, %v283
    %v299 = vadd.f32 %v276, %v283
    %v300 = vadd.f32 %v277, %v283
    %301 = vst [vmem:[%s3] sm:$0xff] %v285
    %302 = vst [vmem:[%s3 + $0x8] sm:$0xff] %v286
    %303 = vst [vmem:[%s3 + $0x10] sm:$0xff] %v287
    %304 = vst [vmem:[%s3 + $0x18] sm:$0xff] %v288
    %305 = vst [vmem:[%s3 + $0x20] sm:$0xff] %v289
    %306 = vst [vmem:[%s3 + $0x28] sm:$0xff] %v290
    %307 = vst [vmem:[%s3 + $0x30] sm:$0xff] %v291
    %308 = vst [vmem:[%s3 + $0x38] sm:$0xff] %v292
    %309 = vst [vmem:[%s3 + $0x40] sm:$0xff] %v293
    %310 = vst [vmem:[%s3 + $0x48] sm:$0xff] %v294
    %311 = vst [vmem:[%s3 + $0x50] sm:$0xff] %v295
    %312 = vst [vmem:[%s3 + $0x58] sm:$0xff] %v296
    %313 = vst [vmem:[%s3 + $0x60] sm:$0xff] %v297
    %314 = vst [vmem:[%s3 + $0x68] sm:$0xff] %v298
    %315 = vst [vmem:[%s3 + $0x70] sm:$0xff] %v299
    %316 = vst [vmem:[%s3 + $0x78] sm:$0xff] %v300
  $region21: #{conv_sn_forward.1} parent=0 // pred_fallthru
    _
  // Predicated region
  $region22: #{conv_sn_forward.1} parent=0 // pred_check
    _
  $region23: #{conv_sn_forward.1} parent=0 // pred_check_branch
    %318 = sbr.rel (0) target = $region25
  $region24: #{conv_sn_forward.1} parent=0 // pred_region
    _
  $region25: #{conv_sn_forward.1} parent=0 // pred_fallthru
    _
  // Predicated region
  $region26: #{conv_sn_forward.1} parent=0 // pred_check
    _
  $region27: #{conv_sn_forward.1} parent=0 // pred_check_branch
    %320 = sbr.rel (0) target = $region29
  $region28: #{conv_sn_forward.1} parent=0 // pred_region
    _
  $region29: #{conv_sn_forward.1} parent=0 // pred_fallthru
    _

</llo_original>
